<compile_context>
chip_gen: v7x
topology: tpu7x:2x2x1
jax: 0.10.0
libtpu: 0.0.40
codegen_flags: <defaults>
</compile_context>

<pallas_src>
import numpy as np
import jax
import jax.numpy as jnp
from jax import lax
from jax.experimental import pallas as pl
from jax.experimental.pallas import tpu as pltpu

# --- small-shape config ------------------------------------------------------
N, CIN, H, W = 2, 4, 16, 16      # input images
COUT = 32                        # ft-block conv channels
KH = KW = 3
PAD = 1
PK = 4                           # MaxPool2d(kernel=4, stride=4)
HO, WO = H // PK, W // PK        # 4, 4
NQ = HO * WO                     # pool cells per image       = 16
NR = PK * PK                     # elements per pool window   = 16
ROWS = N * H * W                 # conv output positions      = 512
K = CIN * KH * KW                # im2col depth               = 36
EPS = 1e-5

GROUP = 4                        # stand-in for opt.num_rows
EMBED = 32                       # stand-in for the 300-d word embedding
C2 = EMBED * GROUP               # conv_embedding out channels = 128 (lane-dense)


def fused_kernel(patches_ref, w1_ref, gamma_ref, beta_ref, w2_ref, b2_ref,
                 out_ref):
    # (1) Conv2d(3x3) as im2col matmul on the MXU: bf16 operands, f32 accumulate.
    y = jnp.dot(patches_ref[...], w1_ref[...],
                preferred_element_type=jnp.float32)            # (ROWS, COUT) f32

    # (2) BatchNorm2d, training-mode batch statistics over N*H*W per channel.
    #     One-pass moments + single fused scale/shift FMA.
    inv_n = jnp.float32(1.0 / ROWS)
    s = jnp.sum(y, axis=0, keepdims=True)                      # (1, COUT)
    ss = jnp.sum(y * y, axis=0, keepdims=True)                 # (1, COUT)
    mean = s * inv_n
    var = ss * inv_n - mean * mean                             # biased batch var
    scale = gamma_ref[...] * lax.rsqrt(var + EPS)
    shift = beta_ref[...] - mean * scale
    y = y * scale + shift

    # (3) MaxPool2d(4,4): rows are ordered (r, n, q) with r the pool-window
    #     offset, so pooling is a pairwise tree-max over contiguous half-slabs
    #     (depth log2(16) = 4).
    size = ROWS
    while size > N * NQ:
        half = size // 2
        y = jnp.maximum(y[:half, :], y[half:, :])
        size = half                                            # -> (N*NQ, COUT)

    # (4) ReLU after the pool: relu(max_r(y_r)) == max_r(relu(y_r)).
    y = jnp.maximum(y, 0.0)

    # (5) conv_embedding (1x1 conv + bias) with channel_shuffle folded into the
    #     pre-permuted weight/bias columns.  Kept in f32: the GEMM is tiny
    #     (32x32x128) and the activations are BN-normalized, so precision wins.
    out_ref[...] = (jnp.dot(y, w2_ref[...],
                            preferred_element_type=jnp.float32)
                    + b2_ref[...])                             # (N*NQ, C2)


def channel_mlzsl_head(x, w1, gamma, beta, w2, b2):
    """x: (N,CIN,H,W) f32. Returns the shuffled conv_embedding map, NCHW."""
    # --- glue: im2col with rows ordered (dh, dw, n, pi, pj) -------------------
    xp = jnp.pad(x, ((0, 0), (0, 0), (PAD, PAD), (PAD, PAD)))
    cols = jnp.stack([xp[:, :, kh:kh + H, kw:kw + W]
                      for kh in range(KH) for kw in range(KW)],
                     axis=2)                                    # (N,CIN,9,H,W)
    cols = cols.reshape(N, CIN, KH * KW, HO, PK, WO, PK)        # (n,ci,kk,pi,dh,pj,dw)
    cols = cols.transpose(4, 6, 0, 3, 5, 1, 2)                  # (dh,dw,n,pi,pj,ci,kk)
    patches = cols.reshape(ROWS, K).astype(jnp.bfloat16)        # row = r*32+n*16+q

    # ft-block weight as (K, COUT), column order (ci, kh, kw) matches patches.
    w1mat = w1.reshape(COUT, K).T.astype(jnp.bfloat16)
    gamma2 = gamma.reshape(1, COUT).astype(jnp.float32)
    beta2 = beta.reshape(1, COUT).astype(jnp.float32)

    # channel_shuffle(groups=GROUP) folded into the 1x1-conv weight/bias:
    # shuffled output channel j = i2*GROUP + g reads original channel
    # perm[j] = g*(C2//GROUP) + i2.
    perm = np.arange(C2).reshape(GROUP, C2 // GROUP).T.reshape(-1)
    w2mat = w2.reshape(C2, COUT).T[:, perm].astype(jnp.float32)  # (COUT, C2)
    b2row = b2[perm].reshape(1, C2).astype(jnp.float32)

    out = pl.pallas_call(
        fused_kernel,
        out_shape=jax.ShapeDtypeStruct((N * NQ, C2), jnp.float32),
        grid=(1,),
        in_specs=[
            pl.BlockSpec((ROWS, K), lambda i: (0, 0)),
            pl.BlockSpec((K, COUT), lambda i: (0, 0)),
            pl.BlockSpec((1, COUT), lambda i: (0, 0)),
            pl.BlockSpec((1, COUT), lambda i: (0, 0)),
            pl.BlockSpec((COUT, C2), lambda i: (0, 0)),
            pl.BlockSpec((1, C2), lambda i: (0, 0)),
        ],
        out_specs=pl.BlockSpec((N * NQ, C2), lambda i: (0, 0)),
        compiler_params=pltpu.CompilerParams(
            dimension_semantics=("arbitrary",)),
        cost_estimate=pl.CostEstimate(
            flops=2 * ROWS * K * COUT            # conv matmul
                  + 10 * ROWS * COUT             # BN moments / FMA / pool / relu
                  + 2 * (N * NQ) * COUT * C2,    # embedding matmul
            transcendentals=COUT,
            bytes_accessed=ROWS * K * 2 + K * COUT * 2 + 2 * COUT * 4
                           + COUT * C2 * 4 + C2 * 4 + N * NQ * C2 * 4),
    )(patches, w1mat, gamma2, beta2, w2mat, b2row)

    # rows = n*NQ + (pi*WO + pj)  ->  NCHW
    return out.reshape(N, HO, WO, C2).transpose(0, 3, 1, 2)


def reference(x, w1, gamma, beta, w2, b2):
    # Conv operands rounded to bf16 to mirror the kernel's MXU path.
    xq = x.astype(jnp.bfloat16).astype(jnp.float32)
    wq = w1.astype(jnp.bfloat16).astype(jnp.float32)
    y = lax.conv_general_dilated(
        xq, wq, window_strides=(1, 1), padding=((PAD, PAD), (PAD, PAD)),
        dimension_numbers=('NCHW', 'OIHW', 'NCHW'))
    mean = y.mean(axis=(0, 2, 3), keepdims=True)
    var = ((y - mean) ** 2).mean(axis=(0, 2, 3), keepdims=True)
    y = (y - mean) / jnp.sqrt(var + EPS)
    y = y * gamma[None, :, None, None] + beta[None, :, None, None]
    y = jnp.maximum(y, 0.0)
    y = y.reshape(N, COUT, HO, PK, WO, PK).max(axis=(3, 5))     # (N,COUT,HO,WO)

    # conv_embedding (1x1 conv + bias), f32-exact contraction.
    e = jnp.einsum('nchw,oc->nohw', y, w2.reshape(C2, COUT),
                   precision=lax.Precision.HIGHEST) + b2[None, :, None, None]

    # channel_shuffle exactly as in the torch module.
    b_, c_, h_, w_ = e.shape
    e = e.reshape(b_, GROUP, c_ // GROUP, h_, w_)
    e = e.transpose(0, 2, 1, 3, 4).reshape(b_, c_, h_, w_)
    return e


if __name__ == "__main__":
    key = jax.random.PRNGKey(0)
    kx, kw1, kw2, kb2 = jax.random.split(key, 4)
    x = jax.random.normal(kx, (N, CIN, H, W), dtype=jnp.float32)
    w1 = 0.1 * jax.random.normal(kw1, (COUT, CIN, KH, KW), dtype=jnp.float32)
    gamma = 1.0 + 0.01 * jnp.arange(COUT, dtype=jnp.float32)    # BN weight
    beta = 0.02 * jnp.arange(COUT, dtype=jnp.float32) - 0.3     # BN bias
    w2 = 0.1 * jax.random.normal(kw2, (C2, COUT, 1, 1), dtype=jnp.float32)
    b2 = 0.05 * jax.random.normal(kb2, (C2,), dtype=jnp.float32)

    out = jax.jit(channel_mlzsl_head)(x, w1, gamma, beta, w2, b2)
    out = jax.block_until_ready(out)

    ref = reference(x, w1, gamma, beta, w2, b2)
    assert out.shape == (N, C2, HO, WO), out.shape
    err = float(jnp.max(jnp.abs(out - ref)))
    if err > 5e-3:
        raise AssertionError(f"mismatch vs reference, max abs err = {err}")
    print("KERNEL_OK")
</pallas_src>

<mosaic_0001>
module attributes {stable_mosaic.version = 11 : i64} {
  func.func @fused_kernel(%arg0: i32, %arg1: memref<512x36xbf16, #tpu.memory_space<vmem>>, %arg2: memref<36x32xbf16, #tpu.memory_space<vmem>>, %arg3: memref<1x32xf32, #tpu.memory_space<vmem>>, %arg4: memref<1x32xf32, #tpu.memory_space<vmem>>, %arg5: memref<32x128xf32, #tpu.memory_space<vmem>>, %arg6: memref<1x128xf32, #tpu.memory_space<vmem>>, %arg7: memref<32x128xf32, #tpu.memory_space<vmem>>) attributes {dimension_semantics = [#tpu.dimension_semantics<arbitrary>], iteration_bounds = array<i64: 1>, scalar_prefetch = 0 : i64, scratch_operands = 0 : i64, tpu.core_type = #tpu.core_type<tc>, window_params = [{pipeline_mode = #tpu.pipeline_mode<synchronous>, transform_indices = @transform_0, window_bounds = array<i64: 512, 36>}, {pipeline_mode = #tpu.pipeline_mode<synchronous>, transform_indices = @transform_1, window_bounds = array<i64: 36, 32>}, {pipeline_mode = #tpu.pipeline_mode<synchronous>, transform_indices = @transform_2, window_bounds = array<i64: 1, 32>}, {pipeline_mode = #tpu.pipeline_mode<synchronous>, transform_indices = @transform_3, window_bounds = array<i64: 1, 32>}, {pipeline_mode = #tpu.pipeline_mode<synchronous>, transform_indices = @transform_4, window_bounds = array<i64: 32, 128>}, {pipeline_mode = #tpu.pipeline_mode<synchronous>, transform_indices = @transform_5, window_bounds = array<i64: 1, 128>}, {pipeline_mode = #tpu.pipeline_mode<synchronous>, transform_indices = @transform_6, window_bounds = array<i64: 32, 128>}]} {
    %c0 = arith.constant 0 : index
    %c0_0 = arith.constant 0 : index
    %0 = vector.load %arg1[%c0, %c0_0] : memref<512x36xbf16, #tpu.memory_space<vmem>>, vector<512x36xbf16>
    %c0_1 = arith.constant 0 : index
    %c0_2 = arith.constant 0 : index
    %1 = vector.load %arg2[%c0_1, %c0_2] : memref<36x32xbf16, #tpu.memory_space<vmem>>, vector<36x32xbf16>
    %cst = arith.constant dense<0.000000e+00> : vector<512x32xf32>
    %2 = tpu.matmul %0, %1, %cst {dimension_numbers = #tpu.dot_dimension_numbers<[1], [0], [0], [1], [0, 0, 1, 1], [], []>} : vector<512x36xbf16>, vector<36x32xbf16>, vector<512x32xf32> -> vector<512x32xf32>
    %cst_3 = arith.constant dense<0.000000e+00> : vector<32xf32>
    %3 = vector.multi_reduction <add>, %2, %cst_3 [0] : vector<512x32xf32> to vector<32xf32>
    %4 = vector.shape_cast %3 : vector<32xf32> to vector<1x32xf32>
    %5 = arith.mulf %2, %2 : vector<512x32xf32>
    %cst_4 = arith.constant dense<0.000000e+00> : vector<32xf32>
    %6 = vector.multi_reduction <add>, %5, %cst_4 [0] : vector<512x32xf32> to vector<32xf32>
    %7 = vector.shape_cast %6 : vector<32xf32> to vector<1x32xf32>
    %cst_5 = arith.constant 0.001953125 : f32
    %8 = vector.broadcast %cst_5 : f32 to vector<1x32xf32>
    %9 = arith.mulf %4, %8 : vector<1x32xf32>
    %cst_6 = arith.constant 0.001953125 : f32
    %10 = vector.broadcast %cst_6 : f32 to vector<1x32xf32>
    %11 = arith.mulf %7, %10 : vector<1x32xf32>
    %12 = arith.mulf %9, %9 : vector<1x32xf32>
    %13 = arith.subf %11, %12 : vector<1x32xf32>
    %c0_7 = arith.constant 0 : index
    %c0_8 = arith.constant 0 : index
    %14 = vector.load %arg3[%c0_7, %c0_8] : memref<1x32xf32, #tpu.memory_space<vmem>>, vector<1x32xf32>
    %cst_9 = arith.constant 9.99999974E-6 : f32
    %15 = vector.broadcast %cst_9 : f32 to vector<1x32xf32>
    %16 = arith.addf %13, %15 : vector<1x32xf32>
    %17 = math.rsqrt %16 : vector<1x32xf32>
    %18 = arith.mulf %14, %17 : vector<1x32xf32>
    %c0_10 = arith.constant 0 : index
    %c0_11 = arith.constant 0 : index
    %19 = vector.load %arg4[%c0_10, %c0_11] : memref<1x32xf32, #tpu.memory_space<vmem>>, vector<1x32xf32>
    %20 = arith.mulf %9, %18 : vector<1x32xf32>
    %21 = arith.subf %19, %20 : vector<1x32xf32>
    %22 = vector.broadcast %18 : vector<1x32xf32> to vector<512x32xf32>
    %23 = arith.mulf %2, %22 : vector<512x32xf32>
    %24 = vector.broadcast %21 : vector<1x32xf32> to vector<512x32xf32>
    %25 = arith.addf %23, %24 : vector<512x32xf32>
    %26 = vector.extract_strided_slice %25 {offsets = [0, 0], sizes = [256, 32], strides = [1, 1]} : vector<512x32xf32> to vector<256x32xf32>
    %27 = vector.extract_strided_slice %25 {offsets = [256, 0], sizes = [256, 32], strides = [1, 1]} : vector<512x32xf32> to vector<256x32xf32>
    %28 = arith.maximumf %26, %27 : vector<256x32xf32>
    %29 = vector.extract_strided_slice %28 {offsets = [0, 0], sizes = [128, 32], strides = [1, 1]} : vector<256x32xf32> to vector<128x32xf32>
    %30 = vector.extract_strided_slice %28 {offsets = [128, 0], sizes = [128, 32], strides = [1, 1]} : vector<256x32xf32> to vector<128x32xf32>
    %31 = arith.maximumf %29, %30 : vector<128x32xf32>
    %32 = vector.extract_strided_slice %31 {offsets = [0, 0], sizes = [64, 32], strides = [1, 1]} : vector<128x32xf32> to vector<64x32xf32>
    %33 = vector.extract_strided_slice %31 {offsets = [64, 0], sizes = [64, 32], strides = [1, 1]} : vector<128x32xf32> to vector<64x32xf32>
    %34 = arith.maximumf %32, %33 : vector<64x32xf32>
    %35 = vector.extract_strided_slice %34 {offsets = [0, 0], sizes = [32, 32], strides = [1, 1]} : vector<64x32xf32> to vector<32x32xf32>
    %36 = vector.extract_strided_slice %34 {offsets = [32, 0], sizes = [32, 32], strides = [1, 1]} : vector<64x32xf32> to vector<32x32xf32>
    %37 = arith.maximumf %35, %36 : vector<32x32xf32>
    %cst_12 = arith.constant 0.000000e+00 : f32
    %38 = vector.broadcast %cst_12 : f32 to vector<32x32xf32>
    %39 = arith.maximumf %37, %38 : vector<32x32xf32>
    %c0_13 = arith.constant 0 : index
    %c0_14 = arith.constant 0 : index
    %40 = vector.load %arg5[%c0_13, %c0_14] : memref<32x128xf32, #tpu.memory_space<vmem>>, vector<32x128xf32>
    %cst_15 = arith.constant dense<0.000000e+00> : vector<32x128xf32>
    %41 = tpu.matmul %39, %40, %cst_15 {dimension_numbers = #tpu.dot_dimension_numbers<[1], [0], [0], [1], [0, 0, 1, 1], [], []>} : vector<32x32xf32>, vector<32x128xf32>, vector<32x128xf32> -> vector<32x128xf32>
    %c0_16 = arith.constant 0 : index
    %c0_17 = arith.constant 0 : index
    %42 = vector.load %arg6[%c0_16, %c0_17] : memref<1x128xf32, #tpu.memory_space<vmem>>, vector<1x128xf32>
    %43 = vector.broadcast %42 : vector<1x128xf32> to vector<32x128xf32>
    %44 = arith.addf %41, %43 : vector<32x128xf32>
    %c0_18 = arith.constant 0 : index
    %c0_19 = arith.constant 0 : index
    %45 = vector.load %arg7[%c0_18, %c0_19] : memref<32x128xf32, #tpu.memory_space<vmem>>, vector<32x128xf32>
    tpu.vector_store %arg7[%c0_18, %c0_19], %44 {strides = array<i32>} : memref<32x128xf32, #tpu.memory_space<vmem>>, vector<32x128xf32>,
    return
  }
  func.func @transform_0(%arg0: i32) -> (i32, i32) {
    %c0_i32 = arith.constant 0 : i32
    %c0_i32_0 = arith.constant 0 : i32
    %c0_i32_1 = arith.constant 0 : i32
    return %c0_i32, %c0_i32_0 : i32, i32
  }
  func.func @transform_1(%arg0: i32) -> (i32, i32) {
    %c0_i32 = arith.constant 0 : i32
    %c0_i32_0 = arith.constant 0 : i32
    %c0_i32_1 = arith.constant 0 : i32
    return %c0_i32, %c0_i32_0 : i32, i32
  }
  func.func @transform_2(%arg0: i32) -> (i32, i32) {
    %c0_i32 = arith.constant 0 : i32
    %c0_i32_0 = arith.constant 0 : i32
    %c0_i32_1 = arith.constant 0 : i32
    return %c0_i32, %c0_i32_0 : i32, i32
  }
  func.func @transform_3(%arg0: i32) -> (i32, i32) {
    %c0_i32 = arith.constant 0 : i32
    %c0_i32_0 = arith.constant 0 : i32
    %c0_i32_1 = arith.constant 0 : i32
    return %c0_i32, %c0_i32_0 : i32, i32
  }
  func.func @transform_4(%arg0: i32) -> (i32, i32) {
    %c0_i32 = arith.constant 0 : i32
    %c0_i32_0 = arith.constant 0 : i32
    %c0_i32_1 = arith.constant 0 : i32
    return %c0_i32, %c0_i32_0 : i32, i32
  }
  func.func @transform_5(%arg0: i32) -> (i32, i32) {
    %c0_i32 = arith.constant 0 : i32
    %c0_i32_0 = arith.constant 0 : i32
    %c0_i32_1 = arith.constant 0 : i32
    return %c0_i32, %c0_i32_0 : i32, i32
  }
  func.func @transform_6(%arg0: i32) -> (i32, i32) {
    %c0_i32 = arith.constant 0 : i32
    %c0_i32_0 = arith.constant 0 : i32
    %c0_i32_1 = arith.constant 0 : i32
    return %c0_i32, %c0_i32_0 : i32, i32
  }
}

</mosaic_0001>

<llo_original>
// kernel: channel_mlzsl_head.1
$region0: #{channel_mlzsl_head.1}
  #allocation0 [shape = 'u32[]', space=smem, size = 0x4, offset = 0x4, fixed_abs, tag = 'smem constant byte address 0x4 - core index']
  #allocation1 [shape = 'u32[144,128]{1,0:T(1,128)}', space=vmem, size = 0x12000, scoped, tag = 'internal scratch']
  %s0 = inlined_call_operand.vmem [shape: bf16[512,36], index: 0, kind: input, shape index: {}]
  %s1 = inlined_call_operand.vmem [shape: bf16[36,32], index: 1, kind: input, shape index: {}]
  %s2 = inlined_call_operand.vmem [shape: f32[1,32], index: 2, kind: input, shape index: {}]
  %s3 = inlined_call_operand.vmem [shape: f32[1,32], index: 3, kind: input, shape index: {}]
  %s4 = inlined_call_operand.vmem [shape: f32[32,128], index: 4, kind: input, shape index: {}]
  %s5 = inlined_call_operand.vmem [shape: f32[1,128], index: 5, kind: input, shape index: {}]
  %s6 = inlined_call_operand.hbm [shape: f32[32,128], index: 6, kind: output, shape index: {}]
  %s7 = sld [smem:[#allocation0]]
  $region34: #{channel_mlzsl_head.1} parent=0
    _
  %s9 = ssub.s32 1, %s7
  %s10 = scalar_select 0, %s9, %s7
  $region1: #{channel_mlzsl_head.1} parent=0
    #allocation2 [shape = 'u8[16384]{0}', space=vmem, size = 0x4000, scoped, tag = 'output window, operand 0, single buffered']
    #allocation3 [shape = 's32[1]{0}', space=sflag, size = 0x4, scoped, tag = 'scoped memory for channel_mlzsl_head.1']
    %11 = vsyncpa [#allocation3], 0
    // Predicated region
    $region2: #{channel_mlzsl_head.1} parent=1 // pred_check
      _
    $region3: #{channel_mlzsl_head.1} parent=1 // pred_check_branch
      %13 = sbr.rel (0) target = $region5
    $region4: #{channel_mlzsl_head.1} parent=1 // pred_region
      _
    $region5: #{channel_mlzsl_head.1} parent=1 // pred_fallthru
      _
    // Predicated region
    $region6: #{channel_mlzsl_head.1} parent=1 // pred_check
      _
    $region7: #{channel_mlzsl_head.1} parent=1 // pred_check_branch
      %15 = sbr.rel (0) target = $region9
    $region8: #{channel_mlzsl_head.1} parent=1 // pred_region
      _
    $region9: #{channel_mlzsl_head.1} parent=1 // pred_fallthru
      _
    // Predicated region
    $region10: #{channel_mlzsl_head.1} parent=1 // pred_check
      _
    $region11: #{channel_mlzsl_head.1} parent=1 // pred_check_branch
      %17 = sbr.rel (0) target = $region13
    $region12: #{channel_mlzsl_head.1} parent=1 // pred_region
      _
    $region13: #{channel_mlzsl_head.1} parent=1 // pred_fallthru
      _
    // Predicated region
    $region14: #{channel_mlzsl_head.1} parent=1 // pred_check
      _
    $region15: #{channel_mlzsl_head.1} parent=1 // pred_check_branch
      %19 = sbr.rel (0) target = $region17
    $region16: #{channel_mlzsl_head.1} parent=1 // pred_region
      _
    $region17: #{channel_mlzsl_head.1} parent=1 // pred_fallthru
      _
    // Predicated region
    $region18: #{channel_mlzsl_head.1} parent=1 // pred_check
      _
    $region19: #{channel_mlzsl_head.1} parent=1 // pred_check_branch
      %21 = sbr.rel (0) target = $region21
    $region20: #{channel_mlzsl_head.1} parent=1 // pred_region
      _
    $region21: #{channel_mlzsl_head.1} parent=1 // pred_fallthru
      _
    // Predicated region
    $region22: #{channel_mlzsl_head.1} parent=1 // pred_check
      _
    $region23: #{channel_mlzsl_head.1} parent=1 // pred_check_branch
      %23 = sbr.rel (0) target = $region25
    $region24: #{channel_mlzsl_head.1} parent=1 // pred_region
      _
    $region25: #{channel_mlzsl_head.1} parent=1 // pred_fallthru
      _
    %v25 = vld [vmem:[%s0] sm:$0xf]
    %v26 = vld [vmem:[%s0 + $0x4] sm:$0xf]
    %v27 = vld [vmem:[%s0 + $0x8] sm:$0xf]
    %v28 = vld [vmem:[%s0 + $0xc] sm:$0xf]
    %v29 = vld [vmem:[%s0 + $0x10] sm:$0xf]
    %v30 = vld [vmem:[%s0 + $0x14] sm:$0xf]
    %v31 = vld [vmem:[%s0 + $0x18] sm:$0xf]
    %v32 = vld [vmem:[%s0 + $0x1c] sm:$0xf]
    %v33 = vld [vmem:[%s0 + $0x20] sm:$0xf]
    %v34 = vld [vmem:[%s0 + $0x24] sm:$0xf]
    %v35 = vld [vmem:[%s0 + $0x28] sm:$0xf]
    %v36 = vld [vmem:[%s0 + $0x2c] sm:$0xf]
    %v37 = vld [vmem:[%s0 + $0x30] sm:$0xf]
    %v38 = vld [vmem:[%s0 + $0x34] sm:$0xf]
    %v39 = vld [vmem:[%s0 + $0x38] sm:$0xf]
    %v40 = vld [vmem:[%s0 + $0x3c] sm:$0xf]
    %v41 = vld [vmem:[%s0 + $0x40] sm:$0xf]
    %v42 = vld [vmem:[%s0 + $0x44] sm:$0xf]
    %v43 = vld [vmem:[%s0 + $0x48] sm:$0xf]
    %v44 = vld [vmem:[%s0 + $0x4c] sm:$0xf]
    %v45 = vld [vmem:[%s0 + $0x50] sm:$0xf]
    %v46 = vld [vmem:[%s0 + $0x54] sm:$0xf]
    %v47 = vld [vmem:[%s0 + $0x58] sm:$0xf]
    %v48 = vld [vmem:[%s0 + $0x5c] sm:$0xf]
    %v49 = vld [vmem:[%s0 + $0x60] sm:$0xf]
    %v50 = vld [vmem:[%s0 + $0x64] sm:$0xf]
    %v51 = vld [vmem:[%s0 + $0x68] sm:$0xf]
    %v52 = vld [vmem:[%s0 + $0x6c] sm:$0xf]
    %v53 = vld [vmem:[%s0 + $0x70] sm:$0xf]
    %v54 = vld [vmem:[%s0 + $0x74] sm:$0xf]
    %v55 = vld [vmem:[%s0 + $0x78] sm:$0xf]
    %v56 = vld [vmem:[%s0 + $0x7c] sm:$0xf]
    %v57 = vld [vmem:[%s0 + $0x80] sm:$0xf]
    %v58 = vld [vmem:[%s0 + $0x84] sm:$0xf]
    %v59 = vld [vmem:[%s0 + $0x88] sm:$0xf]
    %v60 = vld [vmem:[%s0 + $0x8c] sm:$0xf]
    %v61 = vld [vmem:[%s0 + $0x90] sm:$0xf]
    %v62 = vld [vmem:[%s0 + $0x94] sm:$0xf]
    %v63 = vld [vmem:[%s0 + $0x98] sm:$0xf]
    %v64 = vld [vmem:[%s0 + $0x9c] sm:$0xf]
    %v65 = vld [vmem:[%s0 + $0xa0] sm:$0xf]
    %v66 = vld [vmem:[%s0 + $0xa4] sm:$0xf]
    %v67 = vld [vmem:[%s0 + $0xa8] sm:$0xf]
    %v68 = vld [vmem:[%s0 + $0xac] sm:$0xf]
    %v69 = vld [vmem:[%s0 + $0xb0] sm:$0xf]
    %v70 = vld [vmem:[%s0 + $0xb4] sm:$0xf]
    %v71 = vld [vmem:[%s0 + $0xb8] sm:$0xf]
    %v72 = vld [vmem:[%s0 + $0xbc] sm:$0xf]
    %v73 = vld [vmem:[%s0 + $0xc0] sm:$0xf]
    %v74 = vld [vmem:[%s0 + $0xc4] sm:$0xf]
    %v75 = vld [vmem:[%s0 + $0xc8] sm:$0xf]
    %v76 = vld [vmem:[%s0 + $0xcc] sm:$0xf]
    %v77 = vld [vmem:[%s0 + $0xd0] sm:$0xf]
    %v78 = vld [vmem:[%s0 + $0xd4] sm:$0xf]
    %v79 = vld [vmem:[%s0 + $0xd8] sm:$0xf]
    %v80 = vld [vmem:[%s0 + $0xdc] sm:$0xf]
    %v81 = vld [vmem:[%s0 + $0xe0] sm:$0xf]
    %v82 = vld [vmem:[%s0 + $0xe4] sm:$0xf]
    %v83 = vld [vmem:[%s0 + $0xe8] sm:$0xf]
    %v84 = vld [vmem:[%s0 + $0xec] sm:$0xf]
    %v85 = vld [vmem:[%s0 + $0xf0] sm:$0xf]
    %v86 = vld [vmem:[%s0 + $0xf4] sm:$0xf]
    %v87 = vld [vmem:[%s0 + $0xf8] sm:$0xf]
    %v88 = vld [vmem:[%s0 + $0xfc] sm:$0xf]
    %v89 = vld [vmem:[%s1] sm:$0xf]
    %v90 = vld [vmem:[%s1 + $0x4] sm:$0xf]
    %v91 = vld [vmem:[%s1 + $0x8] sm:$0xf]
    %v92 = vld [vmem:[%s1 + $0xc] sm:$0xf]
    %v93 = vld [vmem:[%s1 + $0x10] sm:$0x3]
    %v158 = vunpack.c.l.b16 %v25
    %v159 = vunpack.c.l.b16 %v26
    %v160 = vunpack.c.l.b16 %v27
    %v161 = vunpack.c.l.b16 %v28
    %v162 = vunpack.c.l.b16 %v29
    %v163 = vunpack.c.l.b16 %v30
    %v164 = vunpack.c.l.b16 %v31
    %v165 = vunpack.c.l.b16 %v32
    %v166 = vunpack.c.l.b16 %v33
    %v167 = vunpack.c.l.b16 %v34
    %v168 = vunpack.c.l.b16 %v35
    %v169 = vunpack.c.l.b16 %v36
    %v170 = vunpack.c.l.b16 %v37
    %v171 = vunpack.c.l.b16 %v38
    %v172 = vunpack.c.l.b16 %v39
    %v173 = vunpack.c.l.b16 %v40
    %v174 = vunpack.c.l.b16 %v41
    %v175 = vunpack.c.l.b16 %v42
    %v176 = vunpack.c.l.b16 %v43
    %v177 = vunpack.c.l.b16 %v44
    %v178 = vunpack.c.l.b16 %v45
    %v179 = vunpack.c.l.b16 %v46
    %v180 = vunpack.c.l.b16 %v47
    %v181 = vunpack.c.l.b16 %v48
    %v182 = vunpack.c.l.b16 %v49
    %v183 = vunpack.c.l.b16 %v50
    %v184 = vunpack.c.l.b16 %v51
    %v185 = vunpack.c.l.b16 %v52
    %v186 = vunpack.c.l.b16 %v53
    %v187 = vunpack.c.l.b16 %v54
    %v188 = vunpack.c.l.b16 %v55
    %v189 = vunpack.c.l.b16 %v56
    %v190 = vunpack.c.l.b16 %v57
    %v191 = vunpack.c.l.b16 %v58
    %v192 = vunpack.c.l.b16 %v59
    %v193 = vunpack.c.l.b16 %v60
    %v194 = vunpack.c.l.b16 %v61
    %v195 = vunpack.c.l.b16 %v62
    %v196 = vunpack.c.l.b16 %v63
    %v197 = vunpack.c.l.b16 %v64
    %v198 = vunpack.c.l.b16 %v65
    %v199 = vunpack.c.l.b16 %v66
    %v200 = vunpack.c.l.b16 %v67
    %v201 = vunpack.c.l.b16 %v68
    %v202 = vunpack.c.l.b16 %v69
    %v203 = vunpack.c.l.b16 %v70
    %v204 = vunpack.c.l.b16 %v71
    %v205 = vunpack.c.l.b16 %v72
    %v206 = vunpack.c.l.b16 %v73
    %v207 = vunpack.c.l.b16 %v74
    %v208 = vunpack.c.l.b16 %v75
    %v209 = vunpack.c.l.b16 %v76
    %v210 = vunpack.c.l.b16 %v77
    %v211 = vunpack.c.l.b16 %v78
    %v212 = vunpack.c.l.b16 %v79
    %v213 = vunpack.c.l.b16 %v80
    %v214 = vunpack.c.l.b16 %v81
    %v215 = vunpack.c.l.b16 %v82
    %v216 = vunpack.c.l.b16 %v83
    %v217 = vunpack.c.l.b16 %v84
    %v218 = vunpack.c.l.b16 %v85
    %v219 = vunpack.c.l.b16 %v86
    %v220 = vunpack.c.l.b16 %v87
    %v221 = vunpack.c.l.b16 %v88
    %v222 = vpack.c.b16 %v159, %v158
    %v223 = vpack.c.b16 %v161, %v160
    %v224 = vpack.c.b16 %v163, %v162
    %v225 = vpack.c.b16 %v165, %v164
    %v226 = vpack.c.b16 %v167, %v166
    %v227 = vpack.c.b16 %v169, %v168
    %v228 = vpack.c.b16 %v171, %v170
    %v229 = vpack.c.b16 %v173, %v172
    %v230 = vpack.c.b16 %v175, %v174
    %v231 = vpack.c.b16 %v177, %v176
    %v232 = vpack.c.b16 %v179, %v178
    %v233 = vpack.c.b16 %v181, %v180
    %v234 = vpack.c.b16 %v183, %v182
    %v235 = vpack.c.b16 %v185, %v184
    %v236 = vpack.c.b16 %v187, %v186
    %v237 = vpack.c.b16 %v189, %v188
    %v238 = vpack.c.b16 %v191, %v190
    %v239 = vpack.c.b16 %v193, %v192
    %v240 = vpack.c.b16 %v195, %v194
    %v241 = vpack.c.b16 %v197, %v196
    %v242 = vpack.c.b16 %v199, %v198
    %v243 = vpack.c.b16 %v201, %v200
    %v244 = vpack.c.b16 %v203, %v202
    %v245 = vpack.c.b16 %v205, %v204
    %v246 = vpack.c.b16 %v207, %v206
    %v247 = vpack.c.b16 %v209, %v208
    %v248 = vpack.c.b16 %v211, %v210
    %v249 = vpack.c.b16 %v213, %v212
    %v250 = vpack.c.b16 %v215, %v214
    %v251 = vpack.c.b16 %v217, %v216
    %v252 = vpack.c.b16 %v219, %v218
    %v253 = vpack.c.b16 %v221, %v220
    %v259 = vunpack.c.l.b16 %v89
    %v260 = vunpack.c.l.b16 %v90
    %v261 = vunpack.c.l.b16 %v91
    %v262 = vunpack.c.l.b16 %v92
    %v263 = vunpack.c.l.b16 %v93
    %v264 = vpack.c.b16 %v260, %v259
    %v265 = vpack.c.b16 %v262, %v261
    %v266 = vpack.c.b16 %v263, %v263
    %vm269 = vcmask 293888
    %v271 = vsel %vm269, %v222, 0
    %v274 = vsel %vm269, %v223, 0
    %v277 = vsel %vm269, %v224, 0
    %v280 = vsel %vm269, %v225, 0
    %v283 = vsel %vm269, %v226, 0
    %v286 = vsel %vm269, %v227, 0
    %v289 = vsel %vm269, %v228, 0
    %v292 = vsel %vm269, %v229, 0
    %v295 = vsel %vm269, %v230, 0
    %v298 = vsel %vm269, %v231, 0
    %v301 = vsel %vm269, %v232, 0
    %v304 = vsel %vm269, %v233, 0
    %v307 = vsel %vm269, %v234, 0
    %v310 = vsel %vm269, %v235, 0
    %v313 = vsel %vm269, %v236, 0
    %v316 = vsel %vm269, %v237, 0
    %v319 = vsel %vm269, %v238, 0
    %v322 = vsel %vm269, %v239, 0
    %v325 = vsel %vm269, %v240, 0
    %v328 = vsel %vm269, %v241, 0
    %v331 = vsel %vm269, %v242, 0
    %v334 = vsel %vm269, %v243, 0
    %v337 = vsel %vm269, %v244, 0
    %v340 = vsel %vm269, %v245, 0
    %v343 = vsel %vm269, %v246, 0
    %v346 = vsel %vm269, %v247, 0
    %v349 = vsel %vm269, %v248, 0
    %v352 = vsel %vm269, %v249, 0
    %v355 = vsel %vm269, %v250, 0
    %v358 = vsel %vm269, %v251, 0
    %v361 = vsel %vm269, %v252, 0
    %v364 = vsel %vm269, %v253, 0
    %vm366 = vcmask 1041408
    %v368 = vsel %vm366, %v266, 0
    %370 = vmatprep.subr.bf16.mxu0 0
    %371 = vmatpush1.bf16.msra.mxu0 %v264
    %372 = vmatprep.subr.bf16.mxu0 0
    %373 = vmatpush1.bf16.msra.mxu0 %v265
    %374 = vmatprep.subr.bf16.mxu0 0
    %375 = vmatpush1.bf16.msra.mxu0 %v368
    %376 = vmatprep.subr.bf16.mxu0 0
    %377 = vmatpush1.bf16.msra.mxu0 0
    %378 = vmatprep.subr.bf16.mxu0 0
    %379 = vmatpush1.bf16.msra.mxu0 0
    %380 = vmatprep.subr.bf16.mxu0 0
    %381 = vmatpush1.bf16.msra.mxu0 0
    %382 = vmatprep.subr.bf16.mxu0 0
    %383 = vmatpush1.bf16.msra.mxu0 0
    %384 = vmatprep.subr.bf16.mxu0 0
    %385 = vmatpush1.bf16.msra.mxu0 0
    %386 = vmatprep.subr.bf16.mxu0 0
    %387 = vmatpush1.bf16.msra.mxu0 0
    %388 = vmatprep.subr.bf16.mxu0 0
    %389 = vmatpush1.bf16.msra.mxu0 0
    %390 = vmatprep.subr.bf16.mxu0 0
    %391 = vmatpush1.bf16.msra.mxu0 0
    %392 = vmatprep.subr.bf16.mxu0 0
    %393 = vmatpush1.bf16.msra.mxu0 0
    %394 = vmatprep.subr.bf16.mxu0 0
    %395 = vmatpush1.bf16.msra.mxu0 0
    %396 = vmatprep.subr.bf16.mxu0 0
    %397 = vmatpush1.bf16.msra.mxu0 0
    %398 = vmatprep.subr.bf16.mxu0 0
    %399 = vmatpush1.bf16.msra.mxu0 0
    %400 = vmatprep.subr.bf16.mxu0 0
    %401 = vmatpush1.bf16.msra.mxu0 0
    %402 = vmatprep.mubr.bf16.mxu0 0
    %403 = vmatmul.mubr.bf16.gmra.mrb[0].mxu0 %v271
    %v404 = vpop.f32.mrb[0].mxu0
    %v405 = vadd.f32 0.0, %v404
    %v406 = vpop.f32.mrb[0].mxu0
    %v407 = vpop.f32.mrb[0].mxu0
    %v408 = vadd.f32 0.0, %v407
    %v409 = vpop.f32.mrb[0].mxu0
    %410 = vmatprep.mubr.bf16.mxu0 0
    %411 = vmatmul.mubr.bf16.gmra.mrb[0].mxu0 %v274
    %v412 = vpop.f32.mrb[0].mxu0
    %v413 = vadd.f32 0.0, %v412
    %v414 = vpop.f32.mrb[0].mxu0
    %v415 = vpop.f32.mrb[0].mxu0
    %v416 = vadd.f32 0.0, %v415
    %v417 = vpop.f32.mrb[0].mxu0
    %418 = vmatprep.mubr.bf16.mxu0 0
    %419 = vmatmul.mubr.bf16.gmra.mrb[0].mxu0 %v277
    %v420 = vpop.f32.mrb[0].mxu0
    %v421 = vadd.f32 0.0, %v420
    %v422 = vpop.f32.mrb[0].mxu0
    %v423 = vpop.f32.mrb[0].mxu0
    %v424 = vadd.f32 0.0, %v423
    %v425 = vpop.f32.mrb[0].mxu0
    %426 = vmatprep.mubr.bf16.mxu0 0
    %427 = vmatmul.mubr.bf16.gmra.mrb[0].mxu0 %v280
    %v428 = vpop.f32.mrb[0].mxu0
    %v429 = vadd.f32 0.0, %v428
    %v430 = vpop.f32.mrb[0].mxu0
    %v431 = vpop.f32.mrb[0].mxu0
    %v432 = vadd.f32 0.0, %v431
    %v433 = vpop.f32.mrb[0].mxu0
    %434 = vmatprep.mubr.bf16.mxu0 0
    %435 = vmatmul.mubr.bf16.gmra.mrb[0].mxu0 %v283
    %v436 = vpop.f32.mrb[0].mxu0
    %v437 = vadd.f32 0.0, %v436
    %v438 = vpop.f32.mrb[0].mxu0
    %v439 = vpop.f32.mrb[0].mxu0
    %v440 = vadd.f32 0.0, %v439
    %v441 = vpop.f32.mrb[0].mxu0
    %442 = vmatprep.mubr.bf16.mxu0 0
    %443 = vmatmul.mubr.bf16.gmra.mrb[0].mxu0 %v286
    %v444 = vpop.f32.mrb[0].mxu0
    %v445 = vadd.f32 0.0, %v444
    %v446 = vpop.f32.mrb[0].mxu0
    %v447 = vpop.f32.mrb[0].mxu0
    %v448 = vadd.f32 0.0, %v447
    %v449 = vpop.f32.mrb[0].mxu0
    %450 = vmatprep.mubr.bf16.mxu0 0
    %451 = vmatmul.mubr.bf16.gmra.mrb[0].mxu0 %v289
    %v452 = vpop.f32.mrb[0].mxu0
    %v453 = vadd.f32 0.0, %v452
    %v454 = vpop.f32.mrb[0].mxu0
    %v455 = vpop.f32.mrb[0].mxu0
    %v456 = vadd.f32 0.0, %v455
    %v457 = vpop.f32.mrb[0].mxu0
    %458 = vmatprep.mubr.bf16.mxu0 0
    %459 = vmatmul.mubr.bf16.gmra.mrb[0].mxu0 %v292
    %v460 = vpop.f32.mrb[0].mxu0
    %v461 = vadd.f32 0.0, %v460
    %v462 = vpop.f32.mrb[0].mxu0
    %v463 = vpop.f32.mrb[0].mxu0
    %v464 = vadd.f32 0.0, %v463
    %v465 = vpop.f32.mrb[0].mxu0
    %466 = vmatprep.mubr.bf16.mxu0 0
    %467 = vmatmul.mubr.bf16.gmra.mrb[0].mxu0 %v295
    %v468 = vpop.f32.mrb[0].mxu0
    %v469 = vadd.f32 0.0, %v468
    %v470 = vpop.f32.mrb[0].mxu0
    %v471 = vpop.f32.mrb[0].mxu0
    %v472 = vadd.f32 0.0, %v471
    %v473 = vpop.f32.mrb[0].mxu0
    %474 = vmatprep.mubr.bf16.mxu0 0
    %475 = vmatmul.mubr.bf16.gmra.mrb[0].mxu0 %v298
    %v476 = vpop.f32.mrb[0].mxu0
    %v477 = vadd.f32 0.0, %v476
    %v478 = vpop.f32.mrb[0].mxu0
    %v479 = vpop.f32.mrb[0].mxu0
    %v480 = vadd.f32 0.0, %v479
    %v481 = vpop.f32.mrb[0].mxu0
    %482 = vmatprep.mubr.bf16.mxu0 0
    %483 = vmatmul.mubr.bf16.gmra.mrb[0].mxu0 %v301
    %v484 = vpop.f32.mrb[0].mxu0
    %v485 = vadd.f32 0.0, %v484
    %v486 = vpop.f32.mrb[0].mxu0
    %v487 = vpop.f32.mrb[0].mxu0
    %v488 = vadd.f32 0.0, %v487
    %v489 = vpop.f32.mrb[0].mxu0
    %490 = vmatprep.mubr.bf16.mxu0 0
    %491 = vmatmul.mubr.bf16.gmra.mrb[0].mxu0 %v304
    %v492 = vpop.f32.mrb[0].mxu0
    %v493 = vadd.f32 0.0, %v492
    %v494 = vpop.f32.mrb[0].mxu0
    %v495 = vpop.f32.mrb[0].mxu0
    %v496 = vadd.f32 0.0, %v495
    %v497 = vpop.f32.mrb[0].mxu0
    %498 = vmatprep.mubr.bf16.mxu0 0
    %499 = vmatmul.mubr.bf16.gmra.mrb[0].mxu0 %v307
    %v500 = vpop.f32.mrb[0].mxu0
    %v501 = vadd.f32 0.0, %v500
    %v502 = vpop.f32.mrb[0].mxu0
    %v503 = vpop.f32.mrb[0].mxu0
    %v504 = vadd.f32 0.0, %v503
    %v505 = vpop.f32.mrb[0].mxu0
    %506 = vmatprep.mubr.bf16.mxu0 0
    %507 = vmatmul.mubr.bf16.gmra.mrb[0].mxu0 %v310
    %v508 = vpop.f32.mrb[0].mxu0
    %v509 = vadd.f32 0.0, %v508
    %v510 = vpop.f32.mrb[0].mxu0
    %v511 = vpop.f32.mrb[0].mxu0
    %v512 = vadd.f32 0.0, %v511
    %v513 = vpop.f32.mrb[0].mxu0
    %514 = vmatprep.mubr.bf16.mxu0 0
    %515 = vmatmul.mubr.bf16.gmra.mrb[0].mxu0 %v313
    %v516 = vpop.f32.mrb[0].mxu0
    %v517 = vadd.f32 0.0, %v516
    %v518 = vpop.f32.mrb[0].mxu0
    %v519 = vpop.f32.mrb[0].mxu0
    %v520 = vadd.f32 0.0, %v519
    %v521 = vpop.f32.mrb[0].mxu0
    %522 = vmatprep.mubr.bf16.mxu0 0
    %523 = vmatmul.mubr.bf16.gmra.mrb[0].mxu0 %v316
    %v524 = vpop.f32.mrb[0].mxu0
    %v525 = vadd.f32 0.0, %v524
    %v526 = vpop.f32.mrb[0].mxu0
    %v527 = vpop.f32.mrb[0].mxu0
    %v528 = vadd.f32 0.0, %v527
    %v529 = vpop.f32.mrb[0].mxu0
    %530 = vmatprep.mubr.bf16.mxu0 0
    %531 = vmatmul.mubr.bf16.gmra.mrb[0].mxu0 %v319
    %v532 = vpop.f32.mrb[0].mxu0
    %v533 = vadd.f32 0.0, %v532
    %v534 = vpop.f32.mrb[0].mxu0
    %v535 = vpop.f32.mrb[0].mxu0
    %v536 = vadd.f32 0.0, %v535
    %v537 = vpop.f32.mrb[0].mxu0
    %538 = vmatprep.mubr.bf16.mxu0 0
    %539 = vmatmul.mubr.bf16.gmra.mrb[0].mxu0 %v322
    %v540 = vpop.f32.mrb[0].mxu0
    %v541 = vadd.f32 0.0, %v540
    %v542 = vpop.f32.mrb[0].mxu0
    %v543 = vpop.f32.mrb[0].mxu0
    %v544 = vadd.f32 0.0, %v543
    %v545 = vpop.f32.mrb[0].mxu0
    %546 = vmatprep.mubr.bf16.mxu0 0
    %547 = vmatmul.mubr.bf16.gmra.mrb[0].mxu0 %v325
    %v548 = vpop.f32.mrb[0].mxu0
    %v549 = vadd.f32 0.0, %v548
    %v550 = vpop.f32.mrb[0].mxu0
    %v551 = vpop.f32.mrb[0].mxu0
    %v552 = vadd.f32 0.0, %v551
    %v553 = vpop.f32.mrb[0].mxu0
    %554 = vmatprep.mubr.bf16.mxu0 0
    %555 = vmatmul.mubr.bf16.gmra.mrb[0].mxu0 %v328
    %v556 = vpop.f32.mrb[0].mxu0
    %v557 = vadd.f32 0.0, %v556
    %v558 = vpop.f32.mrb[0].mxu0
    %v559 = vpop.f32.mrb[0].mxu0
    %v560 = vadd.f32 0.0, %v559
    %v561 = vpop.f32.mrb[0].mxu0
    %562 = vmatprep.mubr.bf16.mxu0 0
    %563 = vmatmul.mubr.bf16.gmra.mrb[0].mxu0 %v331
    %v564 = vpop.f32.mrb[0].mxu0
    %v565 = vadd.f32 0.0, %v564
    %v566 = vpop.f32.mrb[0].mxu0
    %v567 = vpop.f32.mrb[0].mxu0
    %v568 = vadd.f32 0.0, %v567
    %v569 = vpop.f32.mrb[0].mxu0
    %570 = vmatprep.mubr.bf16.mxu0 0
    %571 = vmatmul.mubr.bf16.gmra.mrb[0].mxu0 %v334
    %v572 = vpop.f32.mrb[0].mxu0
    %v573 = vadd.f32 0.0, %v572
    %v574 = vpop.f32.mrb[0].mxu0
    %v575 = vpop.f32.mrb[0].mxu0
    %v576 = vadd.f32 0.0, %v575
    %v577 = vpop.f32.mrb[0].mxu0
    %578 = vmatprep.mubr.bf16.mxu0 0
    %579 = vmatmul.mubr.bf16.gmra.mrb[0].mxu0 %v337
    %v580 = vpop.f32.mrb[0].mxu0
    %v581 = vadd.f32 0.0, %v580
    %v582 = vpop.f32.mrb[0].mxu0
    %v583 = vpop.f32.mrb[0].mxu0
    %v584 = vadd.f32 0.0, %v583
    %v585 = vpop.f32.mrb[0].mxu0
    %586 = vmatprep.mubr.bf16.mxu0 0
    %587 = vmatmul.mubr.bf16.gmra.mrb[0].mxu0 %v340
    %v588 = vpop.f32.mrb[0].mxu0
    %v589 = vadd.f32 0.0, %v588
    %v590 = vpop.f32.mrb[0].mxu0
    %v591 = vpop.f32.mrb[0].mxu0
    %v592 = vadd.f32 0.0, %v591
    %v593 = vpop.f32.mrb[0].mxu0
    %594 = vmatprep.mubr.bf16.mxu0 0
    %595 = vmatmul.mubr.bf16.gmra.mrb[0].mxu0 %v343
    %v596 = vpop.f32.mrb[0].mxu0
    %v597 = vadd.f32 0.0, %v596
    %v598 = vpop.f32.mrb[0].mxu0
    %v599 = vpop.f32.mrb[0].mxu0
    %v600 = vadd.f32 0.0, %v599
    %v601 = vpop.f32.mrb[0].mxu0
    %602 = vmatprep.mubr.bf16.mxu0 0
    %603 = vmatmul.mubr.bf16.gmra.mrb[0].mxu0 %v346
    %v604 = vpop.f32.mrb[0].mxu0
    %v605 = vadd.f32 0.0, %v604
    %v606 = vpop.f32.mrb[0].mxu0
    %v607 = vpop.f32.mrb[0].mxu0
    %v608 = vadd.f32 0.0, %v607
    %v609 = vpop.f32.mrb[0].mxu0
    %610 = vmatprep.mubr.bf16.mxu0 0
    %611 = vmatmul.mubr.bf16.gmra.mrb[0].mxu0 %v349
    %v612 = vpop.f32.mrb[0].mxu0
    %v613 = vadd.f32 0.0, %v612
    %v614 = vpop.f32.mrb[0].mxu0
    %v615 = vpop.f32.mrb[0].mxu0
    %v616 = vadd.f32 0.0, %v615
    %v617 = vpop.f32.mrb[0].mxu0
    %618 = vmatprep.mubr.bf16.mxu0 0
    %619 = vmatmul.mubr.bf16.gmra.mrb[0].mxu0 %v352
    %v620 = vpop.f32.mrb[0].mxu0
    %v621 = vadd.f32 0.0, %v620
    %v622 = vpop.f32.mrb[0].mxu0
    %v623 = vpop.f32.mrb[0].mxu0
    %v624 = vadd.f32 0.0, %v623
    %v625 = vpop.f32.mrb[0].mxu0
    %626 = vmatprep.mubr.bf16.mxu0 0
    %627 = vmatmul.mubr.bf16.gmra.mrb[0].mxu0 %v355
    %v628 = vpop.f32.mrb[0].mxu0
    %v629 = vadd.f32 0.0, %v628
    %v630 = vpop.f32.mrb[0].mxu0
    %v631 = vpop.f32.mrb[0].mxu0
    %v632 = vadd.f32 0.0, %v631
    %v633 = vpop.f32.mrb[0].mxu0
    %634 = vmatprep.mubr.bf16.mxu0 0
    %635 = vmatmul.mubr.bf16.gmra.mrb[0].mxu0 %v358
    %v636 = vpop.f32.mrb[0].mxu0
    %v637 = vadd.f32 0.0, %v636
    %v638 = vpop.f32.mrb[0].mxu0
    %v639 = vpop.f32.mrb[0].mxu0
    %v640 = vadd.f32 0.0, %v639
    %v641 = vpop.f32.mrb[0].mxu0
    %642 = vmatprep.mubr.bf16.mxu0 0
    %643 = vmatmul.mubr.bf16.gmra.mrb[0].mxu0 %v361
    %v644 = vpop.f32.mrb[0].mxu0
    %v645 = vadd.f32 0.0, %v644
    %v646 = vpop.f32.mrb[0].mxu0
    %v647 = vpop.f32.mrb[0].mxu0
    %v648 = vadd.f32 0.0, %v647
    %v649 = vpop.f32.mrb[0].mxu0
    %650 = vmatprep.mubr.bf16.mxu0 0
    %651 = vmatmul.mubr.bf16.gmra.mrb[0].mxu0 %v364
    %v652 = vpop.f32.mrb[0].mxu0
    %v653 = vadd.f32 0.0, %v652
    %v654 = vpop.f32.mrb[0].mxu0
    %v655 = vpop.f32.mrb[0].mxu0
    %v656 = vadd.f32 0.0, %v655
    %v657 = vpop.f32.mrb[0].mxu0
    %658 = vdwg.mxu0
    %vm659 = vcmask 261120
    %v660 = vsel %vm659, %v405, 0.0
    %v661 = vsel %vm659, %v408, 0.0
    %v662 = vadd.f32 %v660, %v661
    %v663 = vsel %vm659, %v413, 0.0
    %v664 = vadd.f32 %v662, %v663
    %v665 = vsel %vm659, %v416, 0.0
    %v666 = vadd.f32 %v664, %v665
    %v667 = vsel %vm659, %v421, 0.0
    %v668 = vadd.f32 %v666, %v667
    %v669 = vsel %vm659, %v424, 0.0
    %v670 = vadd.f32 %v668, %v669
    %v671 = vsel %vm659, %v429, 0.0
    %v672 = vadd.f32 %v670, %v671
    %v673 = vsel %vm659, %v432, 0.0
    %v674 = vadd.f32 %v672, %v673
    %v675 = vsel %vm659, %v437, 0.0
    %v676 = vadd.f32 %v674, %v675
    %v677 = vsel %vm659, %v440, 0.0
    %v678 = vadd.f32 %v676, %v677
    %v679 = vsel %vm659, %v445, 0.0
    %v680 = vadd.f32 %v678, %v679
    %v681 = vsel %vm659, %v448, 0.0
    %v682 = vadd.f32 %v680, %v681
    %v683 = vsel %vm659, %v453, 0.0
    %v684 = vadd.f32 %v682, %v683
    %v685 = vsel %vm659, %v456, 0.0
    %v686 = vadd.f32 %v684, %v685
    %v687 = vsel %vm659, %v461, 0.0
    %v688 = vadd.f32 %v686, %v687
    %v689 = vsel %vm659, %v464, 0.0
    %v690 = vadd.f32 %v688, %v689
    %v691 = vsel %vm659, %v469, 0.0
    %v692 = vadd.f32 %v690, %v691
    %v693 = vsel %vm659, %v472, 0.0
    %v694 = vadd.f32 %v692, %v693
    %v695 = vsel %vm659, %v477, 0.0
    %v696 = vadd.f32 %v694, %v695
    %v697 = vsel %vm659, %v480, 0.0
    %v698 = vadd.f32 %v696, %v697
    %v699 = vsel %vm659, %v485, 0.0
    %v700 = vadd.f32 %v698, %v699
    %v701 = vsel %vm659, %v488, 0.0
    %v702 = vadd.f32 %v700, %v701
    %v703 = vsel %vm659, %v493, 0.0
    %v704 = vadd.f32 %v702, %v703
    %v705 = vsel %vm659, %v496, 0.0
    %v706 = vadd.f32 %v704, %v705
    %v707 = vsel %vm659, %v501, 0.0
    %v708 = vadd.f32 %v706, %v707
    %v709 = vsel %vm659, %v504, 0.0
    %v710 = vadd.f32 %v708, %v709
    %v711 = vsel %vm659, %v509, 0.0
    %v712 = vadd.f32 %v710, %v711
    %v713 = vsel %vm659, %v512, 0.0
    %v714 = vadd.f32 %v712, %v713
    %v715 = vsel %vm659, %v517, 0.0
    %v716 = vadd.f32 %v714, %v715
    %v717 = vsel %vm659, %v520, 0.0
    %v718 = vadd.f32 %v716, %v717
    %v719 = vsel %vm659, %v525, 0.0
    %v720 = vadd.f32 %v718, %v719
    %v721 = vsel %vm659, %v528, 0.0
    %v722 = vadd.f32 %v720, %v721
    %v723 = vsel %vm659, %v533, 0.0
    %v724 = vadd.f32 %v722, %v723
    %v725 = vsel %vm659, %v536, 0.0
    %v726 = vadd.f32 %v724, %v725
    %v727 = vsel %vm659, %v541, 0.0
    %v728 = vadd.f32 %v726, %v727
    %v729 = vsel %vm659, %v544, 0.0
    %v730 = vadd.f32 %v728, %v729
    %v731 = vsel %vm659, %v549, 0.0
    %v732 = vadd.f32 %v730, %v731
    %v733 = vsel %vm659, %v552, 0.0
    %v734 = vadd.f32 %v732, %v733
    %v735 = vsel %vm659, %v557, 0.0
    %v736 = vadd.f32 %v734, %v735
    %v737 = vsel %vm659, %v560, 0.0
    %v738 = vadd.f32 %v736, %v737
    %v739 = vsel %vm659, %v565, 0.0
    %v740 = vadd.f32 %v738, %v739
    %v741 = vsel %vm659, %v568, 0.0
    %v742 = vadd.f32 %v740, %v741
    %v743 = vsel %vm659, %v573, 0.0
    %v744 = vadd.f32 %v742, %v743
    %v745 = vsel %vm659, %v576, 0.0
    %v746 = vadd.f32 %v744, %v745
    %v747 = vsel %vm659, %v581, 0.0
    %v748 = vadd.f32 %v746, %v747
    %v749 = vsel %vm659, %v584, 0.0
    %v750 = vadd.f32 %v748, %v749
    %v751 = vsel %vm659, %v589, 0.0
    %v752 = vadd.f32 %v750, %v751
    %v753 = vsel %vm659, %v592, 0.0
    %v754 = vadd.f32 %v752, %v753
    %v755 = vsel %vm659, %v597, 0.0
    %v756 = vadd.f32 %v754, %v755
    %v757 = vsel %vm659, %v600, 0.0
    %v758 = vadd.f32 %v756, %v757
    %v759 = vsel %vm659, %v605, 0.0
    %v760 = vadd.f32 %v758, %v759
    %v761 = vsel %vm659, %v608, 0.0
    %v762 = vadd.f32 %v760, %v761
    %v763 = vsel %vm659, %v613, 0.0
    %v764 = vadd.f32 %v762, %v763
    %v765 = vsel %vm659, %v616, 0.0
    %v766 = vadd.f32 %v764, %v765
    %v767 = vsel %vm659, %v621, 0.0
    %v768 = vadd.f32 %v766, %v767
    %v769 = vsel %vm659, %v624, 0.0
    %v770 = vadd.f32 %v768, %v769
    %v771 = vsel %vm659, %v629, 0.0
    %v772 = vadd.f32 %v770, %v771
    %v773 = vsel %vm659, %v632, 0.0
    %v774 = vadd.f32 %v772, %v773
    %v775 = vsel %vm659, %v637, 0.0
    %v776 = vadd.f32 %v774, %v775
    %v777 = vsel %vm659, %v640, 0.0
    %v778 = vadd.f32 %v776, %v777
    %v779 = vsel %vm659, %v645, 0.0
    %v780 = vadd.f32 %v778, %v779
    %v781 = vsel %vm659, %v648, 0.0
    %v782 = vadd.f32 %v780, %v781
    %v783 = vsel %vm659, %v653, 0.0
    %v784 = vadd.f32 %v782, %v783
    %v785 = vsel %vm659, %v656, 0.0
    %v786 = vadd.f32 %v784, %v785
    %v787 = vrot.slane %v786, 4
    %v788 = vadd.f32 %v786, %v787
    %v789 = vrot.slane %v788, 2
    %v790 = vadd.f32 %v788, %v789
    %v791 = vrot.slane %v790, 1
    %v792 = vadd.f32 %v790, %v791
    %v793 = vmul.f32 %v405, %v405
    %v794 = vmul.f32 %v408, %v408
    %v795 = vmul.f32 %v413, %v413
    %v796 = vmul.f32 %v416, %v416
    %v797 = vmul.f32 %v421, %v421
    %v798 = vmul.f32 %v424, %v424
    %v799 = vmul.f32 %v429, %v429
    %v800 = vmul.f32 %v432, %v432
    %v801 = vmul.f32 %v437, %v437
    %v802 = vmul.f32 %v440, %v440
    %v803 = vmul.f32 %v445, %v445
    %v804 = vmul.f32 %v448, %v448
    %v805 = vmul.f32 %v453, %v453
    %v806 = vmul.f32 %v456, %v456
    %v807 = vmul.f32 %v461, %v461
    %v808 = vmul.f32 %v464, %v464
    %v809 = vmul.f32 %v469, %v469
    %v810 = vmul.f32 %v472, %v472
    %v811 = vmul.f32 %v477, %v477
    %v812 = vmul.f32 %v480, %v480
    %v813 = vmul.f32 %v485, %v485
    %v814 = vmul.f32 %v488, %v488
    %v815 = vmul.f32 %v493, %v493
    %v816 = vmul.f32 %v496, %v496
    %v817 = vmul.f32 %v501, %v501
    %v818 = vmul.f32 %v504, %v504
    %v819 = vmul.f32 %v509, %v509
    %v820 = vmul.f32 %v512, %v512
    %v821 = vmul.f32 %v517, %v517
    %v822 = vmul.f32 %v520, %v520
    %v823 = vmul.f32 %v525, %v525
    %v824 = vmul.f32 %v528, %v528
    %v825 = vmul.f32 %v533, %v533
    %v826 = vmul.f32 %v536, %v536
    %v827 = vmul.f32 %v541, %v541
    %v828 = vmul.f32 %v544, %v544
    %v829 = vmul.f32 %v549, %v549
    %v830 = vmul.f32 %v552, %v552
    %v831 = vmul.f32 %v557, %v557
    %v832 = vmul.f32 %v560, %v560
    %v833 = vmul.f32 %v565, %v565
    %v834 = vmul.f32 %v568, %v568
    %v835 = vmul.f32 %v573, %v573
    %v836 = vmul.f32 %v576, %v576
    %v837 = vmul.f32 %v581, %v581
    %v838 = vmul.f32 %v584, %v584
    %v839 = vmul.f32 %v589, %v589
    %v840 = vmul.f32 %v592, %v592
    %v841 = vmul.f32 %v597, %v597
    %v842 = vmul.f32 %v600, %v600
    %v843 = vmul.f32 %v605, %v605
    %v844 = vmul.f32 %v608, %v608
    %v845 = vmul.f32 %v613, %v613
    %v846 = vmul.f32 %v616, %v616
    %v847 = vmul.f32 %v621, %v621
    %v848 = vmul.f32 %v624, %v624
    %v849 = vmul.f32 %v629, %v629
    %v850 = vmul.f32 %v632, %v632
    %v851 = vmul.f32 %v637, %v637
    %v852 = vmul.f32 %v640, %v640
    %v853 = vmul.f32 %v645, %v645
    %v854 = vmul.f32 %v648, %v648
    %v855 = vmul.f32 %v653, %v653
    %v856 = vmul.f32 %v656, %v656
    %v857 = vsel %vm659, %v793, 0.0
    %v858 = vsel %vm659, %v794, 0.0
    %v859 = vadd.f32 %v857, %v858
    %v860 = vsel %vm659, %v795, 0.0
    %v861 = vadd.f32 %v859, %v860
    %v862 = vsel %vm659, %v796, 0.0
    %v863 = vadd.f32 %v861, %v862
    %v864 = vsel %vm659, %v797, 0.0
    %v865 = vadd.f32 %v863, %v864
    %v866 = vsel %vm659, %v798, 0.0
    %v867 = vadd.f32 %v865, %v866
    %v868 = vsel %vm659, %v799, 0.0
    %v869 = vadd.f32 %v867, %v868
    %v870 = vsel %vm659, %v800, 0.0
    %v871 = vadd.f32 %v869, %v870
    %v872 = vsel %vm659, %v801, 0.0
    %v873 = vadd.f32 %v871, %v872
    %v874 = vsel %vm659, %v802, 0.0
    %v875 = vadd.f32 %v873, %v874
    %v876 = vsel %vm659, %v803, 0.0
    %v877 = vadd.f32 %v875, %v876
    %v878 = vsel %vm659, %v804, 0.0
    %v879 = vadd.f32 %v877, %v878
    %v880 = vsel %vm659, %v805, 0.0
    %v881 = vadd.f32 %v879, %v880
    %v882 = vsel %vm659, %v806, 0.0
    %v883 = vadd.f32 %v881, %v882
    %v884 = vsel %vm659, %v807, 0.0
    %v885 = vadd.f32 %v883, %v884
    %v886 = vsel %vm659, %v808, 0.0
    %v887 = vadd.f32 %v885, %v886
    %v888 = vsel %vm659, %v809, 0.0
    %v889 = vadd.f32 %v887, %v888
    %v890 = vsel %vm659, %v810, 0.0
    %v891 = vadd.f32 %v889, %v890
    %v892 = vsel %vm659, %v811, 0.0
    %v893 = vadd.f32 %v891, %v892
    %v894 = vsel %vm659, %v812, 0.0
    %v895 = vadd.f32 %v893, %v894
    %v896 = vsel %vm659, %v813, 0.0
    %v897 = vadd.f32 %v895, %v896
    %v898 = vsel %vm659, %v814, 0.0
    %v899 = vadd.f32 %v897, %v898
    %v900 = vsel %vm659, %v815, 0.0
    %v901 = vadd.f32 %v899, %v900
    %v902 = vsel %vm659, %v816, 0.0
    %v903 = vadd.f32 %v901, %v902
    %v904 = vsel %vm659, %v817, 0.0
    %v905 = vadd.f32 %v903, %v904
    %v906 = vsel %vm659, %v818, 0.0
    %v907 = vadd.f32 %v905, %v906
    %v908 = vsel %vm659, %v819, 0.0
    %v909 = vadd.f32 %v907, %v908
    %v910 = vsel %vm659, %v820, 0.0
    %v911 = vadd.f32 %v909, %v910
    %v912 = vsel %vm659, %v821, 0.0
    %v913 = vadd.f32 %v911, %v912
    %v914 = vsel %vm659, %v822, 0.0
    %v915 = vadd.f32 %v913, %v914
    %v916 = vsel %vm659, %v823, 0.0
    %v917 = vadd.f32 %v915, %v916
    %v918 = vsel %vm659, %v824, 0.0
    %v919 = vadd.f32 %v917, %v918
    %v920 = vsel %vm659, %v825, 0.0
    %v921 = vadd.f32 %v919, %v920
    %v922 = vsel %vm659, %v826, 0.0
    %v923 = vadd.f32 %v921, %v922
    %v924 = vsel %vm659, %v827, 0.0
    %v925 = vadd.f32 %v923, %v924
    %v926 = vsel %vm659, %v828, 0.0
    %v927 = vadd.f32 %v925, %v926
    %v928 = vsel %vm659, %v829, 0.0
    %v929 = vadd.f32 %v927, %v928
    %v930 = vsel %vm659, %v830, 0.0
    %v931 = vadd.f32 %v929, %v930
    %v932 = vsel %vm659, %v831, 0.0
    %v933 = vadd.f32 %v931, %v932
    %v934 = vsel %vm659, %v832, 0.0
    %v935 = vadd.f32 %v933, %v934
    %v936 = vsel %vm659, %v833, 0.0
    %v937 = vadd.f32 %v935, %v936
    %v938 = vsel %vm659, %v834, 0.0
    %v939 = vadd.f32 %v937, %v938
    %v940 = vsel %vm659, %v835, 0.0
    %v941 = vadd.f32 %v939, %v940
    %v942 = vsel %vm659, %v836, 0.0
    %v943 = vadd.f32 %v941, %v942
    %v944 = vsel %vm659, %v837, 0.0
    %v945 = vadd.f32 %v943, %v944
    %v946 = vsel %vm659, %v838, 0.0
    %v947 = vadd.f32 %v945, %v946
    %v948 = vsel %vm659, %v839, 0.0
    %v949 = vadd.f32 %v947, %v948
    %v950 = vsel %vm659, %v840, 0.0
    %v951 = vadd.f32 %v949, %v950
    %v952 = vsel %vm659, %v841, 0.0
    %v953 = vadd.f32 %v951, %v952
    %v954 = vsel %vm659, %v842, 0.0
    %v955 = vadd.f32 %v953, %v954
    %v956 = vsel %vm659, %v843, 0.0
    %v957 = vadd.f32 %v955, %v956
    %v958 = vsel %vm659, %v844, 0.0
    %v959 = vadd.f32 %v957, %v958
    %v960 = vsel %vm659, %v845, 0.0
    %v961 = vadd.f32 %v959, %v960
    %v962 = vsel %vm659, %v846, 0.0
    %v963 = vadd.f32 %v961, %v962
    %v964 = vsel %vm659, %v847, 0.0
    %v965 = vadd.f32 %v963, %v964
    %v966 = vsel %vm659, %v848, 0.0
    %v967 = vadd.f32 %v965, %v966
    %v968 = vsel %vm659, %v849, 0.0
    %v969 = vadd.f32 %v967, %v968
    %v970 = vsel %vm659, %v850, 0.0
    %v971 = vadd.f32 %v969, %v970
    %v972 = vsel %vm659, %v851, 0.0
    %v973 = vadd.f32 %v971, %v972
    %v974 = vsel %vm659, %v852, 0.0
    %v975 = vadd.f32 %v973, %v974
    %v976 = vsel %vm659, %v853, 0.0
    %v977 = vadd.f32 %v975, %v976
    %v978 = vsel %vm659, %v854, 0.0
    %v979 = vadd.f32 %v977, %v978
    %v980 = vsel %vm659, %v855, 0.0
    %v981 = vadd.f32 %v979, %v980
    %v982 = vsel %vm659, %v856, 0.0
    %v983 = vadd.f32 %v981, %v982
    %v984 = vrot.slane %v983, 4
    %v985 = vadd.f32 %v983, %v984
    %v986 = vrot.slane %v985, 2
    %v987 = vadd.f32 %v985, %v986
    %v988 = vrot.slane %v987, 1
    %v989 = vadd.f32 %v987, %v988
    %v990 = vmul.f32 %v792, 0.001953125
    %v991 = vmul.f32 %v989, 0.001953125
    %v992 = vmul.f32 %v990, %v990
    %v993 = vsub.f32 %v991, %v992
    %v994 = vld [vmem:[%s2] sm:$0x1]
    %v995 = vadd.f32 %v993, 1e-05
    %v996 = vrsqrt.pop %v995
    %v997 = vmul.f32 %v994, %v996
    %v998 = vld [vmem:[%s3] sm:$0x1]
    %v999 = vmul.f32 %v990, %v997
    %v1000 = vsub.f32 %v998, %v999
    %v1002 = vlaneseq
    %v1003 = vshrl.u32 %v1002, 7
    %v1004 = vsub.s32 0, %v1003
    %v1005 = vrot.slane %v997, %v1004
    %v1007 = vmul.f32 %v405, %v1005
    %v1008 = vmul.f32 %v408, %v1005
    %v1009 = vmul.f32 %v413, %v1005
    %v1010 = vmul.f32 %v416, %v1005
    %v1011 = vmul.f32 %v421, %v1005
    %v1012 = vmul.f32 %v424, %v1005
    %v1013 = vmul.f32 %v429, %v1005
    %v1014 = vmul.f32 %v432, %v1005
    %v1015 = vmul.f32 %v437, %v1005
    %v1016 = vmul.f32 %v440, %v1005
    %v1017 = vmul.f32 %v445, %v1005
    %v1018 = vmul.f32 %v448, %v1005
    %v1019 = vmul.f32 %v453, %v1005
    %v1020 = vmul.f32 %v456, %v1005
    %v1021 = vmul.f32 %v461, %v1005
    %v1022 = vmul.f32 %v464, %v1005
    %v1023 = vmul.f32 %v469, %v1005
    %v1024 = vmul.f32 %v472, %v1005
    %v1025 = vmul.f32 %v477, %v1005
    %v1026 = vmul.f32 %v480, %v1005
    %v1027 = vmul.f32 %v485, %v1005
    %v1028 = vmul.f32 %v488, %v1005
    %v1029 = vmul.f32 %v493, %v1005
    %v1030 = vmul.f32 %v496, %v1005
    %v1031 = vmul.f32 %v501, %v1005
    %v1032 = vmul.f32 %v504, %v1005
    %v1033 = vmul.f32 %v509, %v1005
    %v1034 = vmul.f32 %v512, %v1005
    %v1035 = vmul.f32 %v517, %v1005
    %v1036 = vmul.f32 %v520, %v1005
    %v1037 = vmul.f32 %v525, %v1005
    %v1038 = vmul.f32 %v528, %v1005
    %v1039 = vmul.f32 %v533, %v1005
    %v1040 = vmul.f32 %v536, %v1005
    %v1041 = vmul.f32 %v541, %v1005
    %v1042 = vmul.f32 %v544, %v1005
    %v1043 = vmul.f32 %v549, %v1005
    %v1044 = vmul.f32 %v552, %v1005
    %v1045 = vmul.f32 %v557, %v1005
    %v1046 = vmul.f32 %v560, %v1005
    %v1047 = vmul.f32 %v565, %v1005
    %v1048 = vmul.f32 %v568, %v1005
    %v1049 = vmul.f32 %v573, %v1005
    %v1050 = vmul.f32 %v576, %v1005
    %v1051 = vmul.f32 %v581, %v1005
    %v1052 = vmul.f32 %v584, %v1005
    %v1053 = vmul.f32 %v589, %v1005
    %v1054 = vmul.f32 %v592, %v1005
    %v1055 = vmul.f32 %v597, %v1005
    %v1056 = vmul.f32 %v600, %v1005
    %v1057 = vmul.f32 %v605, %v1005
    %v1058 = vmul.f32 %v608, %v1005
    %v1059 = vmul.f32 %v613, %v1005
    %v1060 = vmul.f32 %v616, %v1005
    %v1061 = vmul.f32 %v621, %v1005
    %v1062 = vmul.f32 %v624, %v1005
    %v1063 = vmul.f32 %v629, %v1005
    %v1064 = vmul.f32 %v632, %v1005
    %v1065 = vmul.f32 %v637, %v1005
    %v1066 = vmul.f32 %v640, %v1005
    %v1067 = vmul.f32 %v645, %v1005
    %v1068 = vmul.f32 %v648, %v1005
    %v1069 = vmul.f32 %v653, %v1005
    %v1070 = vmul.f32 %v656, %v1005
    %v1072 = vlaneseq
    %v1073 = vshrl.u32 %v1072, 7
    %v1074 = vsub.s32 0, %v1073
    %v1075 = vrot.slane %v1000, %v1074
    %v1077 = vadd.f32 %v1007, %v1075
    %v1078 = vadd.f32 %v1008, %v1075
    %v1079 = vadd.f32 %v1009, %v1075
    %v1080 = vadd.f32 %v1010, %v1075
    %v1081 = vadd.f32 %v1011, %v1075
    %v1082 = vadd.f32 %v1012, %v1075
    %v1083 = vadd.f32 %v1013, %v1075
    %v1084 = vadd.f32 %v1014, %v1075
    %v1085 = vadd.f32 %v1015, %v1075
    %v1086 = vadd.f32 %v1016, %v1075
    %v1087 = vadd.f32 %v1017, %v1075
    %v1088 = vadd.f32 %v1018, %v1075
    %v1089 = vadd.f32 %v1019, %v1075
    %v1090 = vadd.f32 %v1020, %v1075
    %v1091 = vadd.f32 %v1021, %v1075
    %v1092 = vadd.f32 %v1022, %v1075
    %v1093 = vadd.f32 %v1023, %v1075
    %v1094 = vadd.f32 %v1024, %v1075
    %v1095 = vadd.f32 %v1025, %v1075
    %v1096 = vadd.f32 %v1026, %v1075
    %v1097 = vadd.f32 %v1027, %v1075
    %v1098 = vadd.f32 %v1028, %v1075
    %v1099 = vadd.f32 %v1029, %v1075
    %v1100 = vadd.f32 %v1030, %v1075
    %v1101 = vadd.f32 %v1031, %v1075
    %v1102 = vadd.f32 %v1032, %v1075
    %v1103 = vadd.f32 %v1033, %v1075
    %v1104 = vadd.f32 %v1034, %v1075
    %v1105 = vadd.f32 %v1035, %v1075
    %v1106 = vadd.f32 %v1036, %v1075
    %v1107 = vadd.f32 %v1037, %v1075
    %v1108 = vadd.f32 %v1038, %v1075
    %v1109 = vadd.f32 %v1039, %v1075
    %v1110 = vadd.f32 %v1040, %v1075
    %v1111 = vadd.f32 %v1041, %v1075
    %v1112 = vadd.f32 %v1042, %v1075
    %v1113 = vadd.f32 %v1043, %v1075
    %v1114 = vadd.f32 %v1044, %v1075
    %v1115 = vadd.f32 %v1045, %v1075
    %v1116 = vadd.f32 %v1046, %v1075
    %v1117 = vadd.f32 %v1047, %v1075
    %v1118 = vadd.f32 %v1048, %v1075
    %v1119 = vadd.f32 %v1049, %v1075
    %v1120 = vadd.f32 %v1050, %v1075
    %v1121 = vadd.f32 %v1051, %v1075
    %v1122 = vadd.f32 %v1052, %v1075
    %v1123 = vadd.f32 %v1053, %v1075
    %v1124 = vadd.f32 %v1054, %v1075
    %v1125 = vadd.f32 %v1055, %v1075
    %v1126 = vadd.f32 %v1056, %v1075
    %v1127 = vadd.f32 %v1057, %v1075
    %v1128 = vadd.f32 %v1058, %v1075
    %v1129 = vadd.f32 %v1059, %v1075
    %v1130 = vadd.f32 %v1060, %v1075
    %v1131 = vadd.f32 %v1061, %v1075
    %v1132 = vadd.f32 %v1062, %v1075
    %v1133 = vadd.f32 %v1063, %v1075
    %v1134 = vadd.f32 %v1064, %v1075
    %v1135 = vadd.f32 %v1065, %v1075
    %v1136 = vadd.f32 %v1066, %v1075
    %v1137 = vadd.f32 %v1067, %v1075
    %v1138 = vadd.f32 %v1068, %v1075
    %v1139 = vadd.f32 %v1069, %v1075
    %v1140 = vadd.f32 %v1070, %v1075
    %v1141 = vmax.f32 %v1077, %v1109
    %v1142 = vmax.f32 %v1078, %v1110
    %v1143 = vmax.f32 %v1079, %v1111
    %v1144 = vmax.f32 %v1080, %v1112
    %v1145 = vmax.f32 %v1081, %v1113
    %v1146 = vmax.f32 %v1082, %v1114
    %v1147 = vmax.f32 %v1083, %v1115
    %v1148 = vmax.f32 %v1084, %v1116
    %v1149 = vmax.f32 %v1085, %v1117
    %v1150 = vmax.f32 %v1086, %v1118
    %v1151 = vmax.f32 %v1087, %v1119
    %v1152 = vmax.f32 %v1088, %v1120
    %v1153 = vmax.f32 %v1089, %v1121
    %v1154 = vmax.f32 %v1090, %v1122
    %v1155 = vmax.f32 %v1091, %v1123
    %v1156 = vmax.f32 %v1092, %v1124
    %v1157 = vmax.f32 %v1093, %v1125
    %v1158 = vmax.f32 %v1094, %v1126
    %v1159 = vmax.f32 %v1095, %v1127
    %v1160 = vmax.f32 %v1096, %v1128
    %v1161 = vmax.f32 %v1097, %v1129
    %v1162 = vmax.f32 %v1098, %v1130
    %v1163 = vmax.f32 %v1099, %v1131
    %v1164 = vmax.f32 %v1100, %v1132
    %v1165 = vmax.f32 %v1101, %v1133
    %v1166 = vmax.f32 %v1102, %v1134
    %v1167 = vmax.f32 %v1103, %v1135
    %v1168 = vmax.f32 %v1104, %v1136
    %v1169 = vmax.f32 %v1105, %v1137
    %v1170 = vmax.f32 %v1106, %v1138
    %v1171 = vmax.f32 %v1107, %v1139
    %v1172 = vmax.f32 %v1108, %v1140
    %v1173 = vmax.f32 %v1141, %v1157
    %v1174 = vmax.f32 %v1142, %v1158
    %v1175 = vmax.f32 %v1143, %v1159
    %v1176 = vmax.f32 %v1144, %v1160
    %v1177 = vmax.f32 %v1145, %v1161
    %v1178 = vmax.f32 %v1146, %v1162
    %v1179 = vmax.f32 %v1147, %v1163
    %v1180 = vmax.f32 %v1148, %v1164
    %v1181 = vmax.f32 %v1149, %v1165
    %v1182 = vmax.f32 %v1150, %v1166
    %v1183 = vmax.f32 %v1151, %v1167
    %v1184 = vmax.f32 %v1152, %v1168
    %v1185 = vmax.f32 %v1153, %v1169
    %v1186 = vmax.f32 %v1154, %v1170
    %v1187 = vmax.f32 %v1155, %v1171
    %v1188 = vmax.f32 %v1156, %v1172
    %v1189 = vmax.f32 %v1173, %v1181
    %v1190 = vmax.f32 %v1174, %v1182
    %v1191 = vmax.f32 %v1175, %v1183
    %v1192 = vmax.f32 %v1176, %v1184
    %v1193 = vmax.f32 %v1177, %v1185
    %v1194 = vmax.f32 %v1178, %v1186
    %v1195 = vmax.f32 %v1179, %v1187
    %v1196 = vmax.f32 %v1180, %v1188
    %v1197 = vmax.f32 %v1189, %v1193
    %v1198 = vmax.f32 %v1190, %v1194
    %v1199 = vmax.f32 %v1191, %v1195
    %v1200 = vmax.f32 %v1192, %v1196
    %v1201 = vmax.f32 %v1197, 0.0
    %v1202 = vmax.f32 %v1198, 0.0
    %v1203 = vmax.f32 %v1199, 0.0
    %v1204 = vmax.f32 %v1200, 0.0
    %v1205 = vld [vmem:[%s4] sm:$0xff]
    %v1206 = vld [vmem:[%s4 + $0x8] sm:$0xff]
    %v1207 = vld [vmem:[%s4 + $0x10] sm:$0xff]
    %v1208 = vld [vmem:[%s4 + $0x18] sm:$0xff]
    %v1209 = vld [vmem:[%s5] sm:$0x1]
    %v1211 = vlaneseq
    %v1212 = vshrl.u32 %v1211, 7
    %v1213 = vsub.s32 0, %v1212
    %v1214 = vrot.slane %v1209, %v1213
    %v1217 = vsel %vm659, %v1201, 0
    %v1220 = vsel %vm659, %v1202, 0
    %v1223 = vsel %vm659, %v1203, 0
    %v1226 = vsel %vm659, %v1204, 0
    %1228 = vmatprep.subr.mxu0 0.0
    %1229 = vmatpush1.msra.mxu0 %v1205
    %1230 = vmatprep.subr.mxu0 0.0
    %1231 = vmatpush1.msra.mxu0 %v1206
    %1232 = vmatprep.subr.mxu0 0.0
    %1233 = vmatpush1.msra.mxu0 %v1207
    %1234 = vmatprep.subr.mxu0 0.0
    %1235 = vmatpush1.msra.mxu0 %v1208
    %1236 = vmatprep.subr.mxu0 0.0
    %1237 = vmatpush1.msra.mxu0 0.0
    %1238 = vmatprep.subr.mxu0 0.0
    %1239 = vmatpush1.msra.mxu0 0.0
    %1240 = vmatprep.subr.mxu0 0.0
    %1241 = vmatpush1.msra.mxu0 0.0
    %1242 = vmatprep.subr.mxu0 0.0
    %1243 = vmatpush1.msra.mxu0 0.0
    %1244 = vmatprep.subr.mxu0 0.0
    %1245 = vmatpush1.msra.mxu0 0.0
    %1246 = vmatprep.subr.mxu0 0.0
    %1247 = vmatpush1.msra.mxu0 0.0
    %1248 = vmatprep.subr.mxu0 0.0
    %1249 = vmatpush1.msra.mxu0 0.0
    %1250 = vmatprep.subr.mxu0 0.0
    %1251 = vmatpush1.msra.mxu0 0.0
    %1252 = vmatprep.subr.mxu0 0.0
    %1253 = vmatpush1.msra.mxu0 0.0
    %1254 = vmatprep.subr.mxu0 0.0
    %1255 = vmatpush1.msra.mxu0 0.0
    %1256 = vmatprep.subr.mxu0 0.0
    %1257 = vmatpush1.msra.mxu0 0.0
    %1258 = vmatprep.subr.mxu0 0.0
    %1259 = vmatpush1.msra.mxu0 0.0
    %1260 = vmatprep.subr.mxu0 0.0
    %1261 = vmatpush1.msra.mxu0 0.0
    %1262 = vmatprep.subr.mxu0 0.0
    %1263 = vmatpush1.msra.mxu0 0.0
    %1264 = vmatprep.subr.mxu0 0.0
    %1265 = vmatpush1.msra.mxu0 0.0
    %1266 = vmatprep.subr.mxu0 0.0
    %1267 = vmatpush1.msra.mxu0 0.0
    %1268 = vmatprep.subr.mxu0 0.0
    %1269 = vmatpush1.msra.mxu0 0.0
    %1270 = vmatprep.subr.mxu0 0.0
    %1271 = vmatpush1.msra.mxu0 0.0
    %1272 = vmatprep.subr.mxu0 0.0
    %1273 = vmatpush1.msra.mxu0 0.0
    %1274 = vmatprep.subr.mxu0 0.0
    %1275 = vmatpush1.msra.mxu0 0.0
    %1276 = vmatprep.subr.mxu0 0.0
    %1277 = vmatpush1.msra.mxu0 0.0
    %1278 = vmatprep.subr.mxu0 0.0
    %1279 = vmatpush1.msra.mxu0 0.0
    %1280 = vmatprep.subr.mxu0 0.0
    %1281 = vmatpush1.msra.mxu0 0.0
    %1282 = vmatprep.subr.mxu0 0.0
    %1283 = vmatpush1.msra.mxu0 0.0
    %1284 = vmatprep.subr.mxu0 0.0
    %1285 = vmatpush1.msra.mxu0 0.0
    %1286 = vmatprep.subr.mxu0 0.0
    %1287 = vmatpush1.msra.mxu0 0.0
    %1288 = vmatprep.subr.mxu0 0.0
    %1289 = vmatpush1.msra.mxu0 0.0
    %1290 = vmatprep.subr.mxu0 0.0
    %1291 = vmatpush1.msra.mxu0 0.0
    %1292 = vmatprep.mubr.f32.mxu0 0.0
    %1293 = vmatmul.mubr.f32.gmra.mrb[0].mxu0 %v1217
    %v1294 = vpop.f32.mrb[0].mxu0
    %v1295 = vadd.f32 %v1214, %v1294
    %v1296 = vpop.f32.mrb[0].mxu0
    %1297 = vmatprep.mubr.f32.mxu0 0.0
    %1298 = vmatmul.mubr.f32.gmra.mrb[0].mxu0 %v1220
    %v1299 = vpop.f32.mrb[0].mxu0
    %v1300 = vadd.f32 %v1214, %v1299
    %v1301 = vpop.f32.mrb[0].mxu0
    %1302 = vmatprep.mubr.f32.mxu0 0.0
    %1303 = vmatmul.mubr.f32.gmra.mrb[0].mxu0 %v1223
    %v1304 = vpop.f32.mrb[0].mxu0
    %v1305 = vadd.f32 %v1214, %v1304
    %v1306 = vpop.f32.mrb[0].mxu0
    %1307 = vmatprep.mubr.f32.mxu0 0.0
    %1308 = vmatmul.mubr.f32.gmra.mrb[0].mxu0 %v1226
    %v1309 = vpop.f32.mrb[0].mxu0
    %v1310 = vadd.f32 %v1214, %v1309
    %v1311 = vpop.f32.mrb[0].mxu0
    %1312 = vdwg.mxu0
    %1313 = vst [vmem:[#allocation2] sm:$0xff] %v1295
    %1314 = vst [vmem:[#allocation2 + $0x8] sm:$0xff] %v1300
    %1315 = vst [vmem:[#allocation2 + $0x10] sm:$0xff] %v1305
    %1316 = vst [vmem:[#allocation2 + $0x18] sm:$0xff] %v1310
    // Predicated region
    $region26: #{channel_mlzsl_head.1} parent=1 // pred_check
      _
    $region27: #{channel_mlzsl_head.1} parent=1 // pred_check_branch
      %1318 = sbr.rel (0) target = $region29
    $region28: #{channel_mlzsl_head.1} parent=1 // pred_region
      %s1320 = ssub.s32 512, 512
      %1321 = vsyncadd [#allocation3], %s1320
      %s1322 = sshll.u32 [#allocation2], 4
      %s1323 = int_to_ptr.vmem [resolvable:$true] %s1322
      %1328 = dma.vmem_to_hbm [thread:$0]  %s1323, 512, %s6, [#allocation3], 128, 128, 8
    $region29: #{channel_mlzsl_head.1} parent=1 // pred_fallthru
      _
    // Predicated region
    $region30: #{channel_mlzsl_head.1} parent=1 // pred_check
      _
    $region31: #{channel_mlzsl_head.1} parent=1 // pred_check_branch
      %1330 = sbr.rel (0) target = $region33
    $region32: #{channel_mlzsl_head.1} parent=1 // pred_region
      %1331 = dma.done [#allocation3], 512
    $region33: #{channel_mlzsl_head.1} parent=1 // pred_fallthru
      _
    %1332 = vsyncpa [#allocation3], 1

</llo_original>
